<compile_context>
chip_gen: v6e
topology: v6e:2x2x1
jax: 0.10.0
libtpu: 0.0.40
codegen_flags: <defaults>
</compile_context>

<pallas_src>
import math

import jax
import jax.numpy as jnp
from jax.experimental import pallas as pl
from jax.experimental.pallas import tpu as pltpu


# ---------------------------------------------------------------------------
# Kernel
# ---------------------------------------------------------------------------
def interface_kernel(x_ref, w_ref, b_ref, o_ref):
    # x_ref : (C, tn)        input pixel tile in its original dtype (e.g. f32);
    #                        cast to the compute dtype HERE so the wrapper does
    #                        not burn an extra HBM pass just for the cast.
    # w_ref : (inplanes, C)  fused weight (bf16), constant block (DMA'd once).
    # b_ref : (inplanes, 1)  fused bias (f32), constant block.
    # o_ref : (inplanes, tn) output tile.
    x = x_ref[...].astype(w_ref.dtype)
    acc = jnp.dot(w_ref[...], x, preferred_element_type=jnp.float32)
    o_ref[...] = (acc + b_ref[...]).astype(o_ref.dtype)


# ---------------------------------------------------------------------------
# Tiling / VMEM sizing
# ---------------------------------------------------------------------------
def _round_up(x, m):
    return ((x + m - 1) // m) * m


def _round_down(x, m):
    return (x // m) * m


def _derive_tn_and_vmem(C, inplanes, WH, B, in_bytes, out_bytes, w_bytes,
                        step_bytes_target=4 << 20,
                        tile_vmem_budget=32 << 20):
    """Pick the lane-tile size tn (multiple of 128) and an explicit scoped-VMEM limit.

    Per grid step the pipeline streams tn*(C*in_bytes + inplanes*out_bytes) bytes
    of HBM traffic and holds 2x (double-buffered) that in VMEM, plus the resident
    fused weight/bias (double-buffered by Pallas even though their index maps are
    constant).  A 32 MiB tile budget stays inside every generation's comfortable
    zone (v5e 16 MiB default scoped / 128 MiB phys, v6e 32/128, v7x 32/64) once
    vmem_limit_bytes is raised to match.
    """
    per_lane_stream = C * in_bytes + inplanes * out_bytes       # HBM bytes / pixel
    per_lane_vmem = 2 * per_lane_stream                         # double-buffered tiles
    const_vmem = 2 * (inplanes * C * w_bytes + inplanes * 4)    # weight + bias (x2 bufs)

    if WH <= 128:
        tn = WH                                                 # full row block (legal)
    else:
        tn_target = _round_up(max(step_bytes_target // per_lane_stream, 1), 128)
        tn_vmax = _round_down(max(tile_vmem_budget - const_vmem, 0) // per_lane_vmem, 128)
        tn = max(128, min(tn_target, max(tn_vmax, 128), _round_up(WH, 128)))
        if B < 2:
            # v7x megacore: keep >= 2 parallel grid blocks so the 2nd TC isn't idle.
            tn = max(128, min(tn, _round_up(pl.cdiv(WH, 2), 128)))

    vmem_needed = per_lane_vmem * tn + const_vmem
    vmem_limit = int(min(max(2 * vmem_needed, 16 << 20), 48 << 20))
    return tn, vmem_limit


# ---------------------------------------------------------------------------
# Wrapper
# ---------------------------------------------------------------------------
def interface_block_pallas(x_nchw, params, *, compute_dtype=jnp.bfloat16,
                           out_dtype=None):
    """Forward of Interface_block.  x_nchw: (B, C, W, H) -> (B, C//2, W, H).

    compute_dtype=jnp.float32 gives strict-parity math (no bf16 rounding);
    out_dtype=jnp.bfloat16 halves writeback traffic if the consumer tolerates it.
    """
    B, C, W, H = x_nchw.shape
    assert C % 2 == 0, "Interface_block requires an even channel count"
    inplanes = C // 2
    out_dtype = x_nchw.dtype if out_dtype is None else out_dtype
    w0, b0, w1, b1, w2, b2 = params     # w0,w1: (inplanes,hid); w2: (hid,inplanes)

    # --- algebraic fusion: two linear 1x1 convs + add + 1x1 conv, no nonlinearity ---
    w_fused = jnp.concatenate([w0, w1], axis=0) @ w2            # (C, inplanes) f32
    b_fused = (b0 + b1) @ w2 + b2                               # (1, inplanes) f32
    w_t = jnp.asarray(w_fused.T, compute_dtype)                 # (inplanes, C)
    b_col = jnp.asarray(b_fused.T, jnp.float32)                 # (inplanes, 1)

    WH = W * H
    # Keep NCHW; just flatten spatial so pixels sit on the lane axis.  The
    # f32->bf16 cast of x happens inside the kernel (no extra wrapper HBM pass).
    x3 = x_nchw.reshape(B, C, WH)

    in_bytes = jnp.dtype(x3.dtype).itemsize
    out_bytes = jnp.dtype(out_dtype).itemsize
    w_bytes = jnp.dtype(compute_dtype).itemsize
    tn, vmem_limit = _derive_tn_and_vmem(C, inplanes, WH, B,
                                         in_bytes, out_bytes, w_bytes)
    grid = (B, pl.cdiv(WH, tn))         # ragged last pixel block is masked by Pallas

    cost = pl.CostEstimate(
        flops=2 * B * WH * C * inplanes,
        transcendentals=0,
        bytes_accessed=(B * C * WH * in_bytes
                        + inplanes * C * w_bytes
                        + B * inplanes * WH * out_bytes),
    )

    # TODO(synk): for very large C (fused weight >> a few MiB, C >= ~8K) add a
    # K-split grid axis over C with an f32 accumulator + pl.when init/finalize,
    # and single-buffer the constant weight/bias blocks (pl.Buffered(1)).
    out3 = pl.pallas_call(
        interface_kernel,
        out_shape=jax.ShapeDtypeStruct((B, inplanes, WH), out_dtype),
        grid_spec=pltpu.PrefetchScalarGridSpec(
            num_scalar_prefetch=0,
            grid=grid,
            in_specs=[
                pl.BlockSpec((None, C, tn), lambda b, t: (b, 0, t)),    # x tile (f32)
                pl.BlockSpec((inplanes, C), lambda b, t: (0, 0)),       # W_fused^T
                pl.BlockSpec((inplanes, 1), lambda b, t: (0, 0)),       # b_fused
            ],
            out_specs=pl.BlockSpec((None, inplanes, tn),
                                   lambda b, t: (b, 0, t)),
        ),
        compiler_params=pltpu.CompilerParams(
            dimension_semantics=("parallel", "parallel"),   # megacore on v7x
            vmem_limit_bytes=vmem_limit),
        cost_estimate=cost,
    )(x3, w_t, b_col)

    return out3.reshape(B, inplanes, W, H)


# ---------------------------------------------------------------------------
# Parameters / references
# ---------------------------------------------------------------------------
def _xavier_uniform(key, shape_out_in):
    # matches nn.init.xavier_uniform_ for a (out, in, 1, 1) conv weight
    fan_out, fan_in = shape_out_in
    limit = math.sqrt(6.0 / (fan_in + fan_out))
    return jax.random.uniform(key, shape_out_in, jnp.float32, -limit, limit)


def make_params(key, inplanes, hide_channel):
    k0, k1, k2 = jax.random.split(key, 3)
    # conv weights are (out, in, 1, 1); stored transposed (in, out) for x @ W
    w0_oi = _xavier_uniform(k0, (hide_channel, inplanes))
    w1_oi = _xavier_uniform(k1, (hide_channel, inplanes))
    w2_oi = _xavier_uniform(k2, (inplanes, hide_channel))
    # conv biases (dim==1) are not xavier'd in the PyTorch module; use zeros.
    b0 = jnp.zeros((1, hide_channel), jnp.float32)
    b1 = jnp.zeros((1, hide_channel), jnp.float32)
    b2 = jnp.zeros((1, inplanes), jnp.float32)
    return (w0_oi.T, b0, w1_oi.T, b1, w2_oi.T, b2)


def reference_forward(x_nchw, params):
    """Original two-layer f32 formulation (matches the PyTorch module)."""
    B, C, W, H = x_nchw.shape
    inplanes = C // 2
    w0, b0, w1, b1, w2, b2 = params
    xf = jnp.transpose(x_nchw, (0, 2, 3, 1)).reshape(-1, C)
    h = xf[:, :inplanes] @ w0 + b0 + xf[:, inplanes:] @ w1 + b1
    out = h @ w2 + b2
    return jnp.transpose(out.reshape(B, W, H, inplanes), (0, 3, 1, 2))


def reference_fused(x_nchw, params, compute_dtype=jnp.bfloat16):
    """Same fused bf16 math as the kernel, in plain XLA (tight check)."""
    B, C, W, H = x_nchw.shape
    inplanes = C // 2
    w0, b0, w1, b1, w2, b2 = params
    w_fused = jnp.concatenate([w0, w1], axis=0) @ w2
    b_fused = (b0 + b1) @ w2 + b2
    x3 = jnp.asarray(x_nchw.reshape(B, C, W * H), compute_dtype)
    wt = jnp.asarray(w_fused.T, compute_dtype)
    out = jnp.einsum("oc,bcn->bon", wt, x3, preferred_element_type=jnp.float32)
    out = out + b_fused.T[None].astype(jnp.float32)
    return out.reshape(B, inplanes, W, H).astype(x_nchw.dtype)


# ---------------------------------------------------------------------------
# Test
# ---------------------------------------------------------------------------
if __name__ == "__main__":
    key = jax.random.PRNGKey(0)
    kx, kx2, kp = jax.random.split(key, 3)

    B, C, W, H = 2, 8, 16, 16            # inplanes = C // 2 = 4
    inplanes, hide_channel = C // 2, 8
    params = make_params(kp, inplanes, hide_channel)

    # Case 1: divisible spatial extent, B=2 (two parallel batch blocks).
    x = jax.random.normal(kx, (B, C, W, H), jnp.float32)
    out = jax.block_until_ready(interface_block_pallas(x, params))
    assert out.shape == (B, inplanes, W, H)
    assert jnp.allclose(out, reference_fused(x, params), atol=1e-3, rtol=1e-3)
    assert jnp.allclose(out, reference_forward(x, params), atol=5e-2, rtol=5e-2)

    # Case 2: B=1 with ragged W*H=208 — exercises the cdiv grid (masked partial
    # last block) and the >=2-parallel-block split for v7x megacore.
    x2 = jax.random.normal(kx2, (1, C, 16, 13), jnp.float32)
    out2 = jax.block_until_ready(interface_block_pallas(x2, params))
    assert out2.shape == (1, inplanes, 16, 13)
    assert jnp.allclose(out2, reference_fused(x2, params), atol=1e-3, rtol=1e-3)
    assert jnp.allclose(out2, reference_forward(x2, params), atol=5e-2, rtol=5e-2)

    print("KERNEL_OK")
</pallas_src>

<mosaic_0001>
module attributes {stable_mosaic.version = 11 : i64} {
  func.func @interface_kernel(%arg0: i32, %arg1: i32, %arg2: memref<1x8x256xf32, #tpu.memory_space<vmem>>, %arg3: memref<4x8xbf16, #tpu.memory_space<vmem>>, %arg4: memref<4x1xf32, #tpu.memory_space<vmem>>, %arg5: memref<1x4x256xf32, #tpu.memory_space<vmem>>) attributes {dimension_semantics = [#tpu.dimension_semantics<parallel>, #tpu.dimension_semantics<parallel>], iteration_bounds = array<i64: 2, 1>, scalar_prefetch = 0 : i64, scratch_operands = 0 : i64, tpu.core_type = #tpu.core_type<tc>, window_params = [{transform_indices = @transform_0, window_bounds = array<i64: 1, 8, 256>}, {pipeline_mode = #tpu.pipeline_mode<synchronous>, transform_indices = @transform_1, window_bounds = array<i64: 4, 8>}, {pipeline_mode = #tpu.pipeline_mode<synchronous>, transform_indices = @transform_2, window_bounds = array<i64: 4, 1>}, {transform_indices = @transform_3, window_bounds = array<i64: 1, 4, 256>}]} {
    %c0 = arith.constant 0 : index
    %c0_0 = arith.constant 0 : index
    %c0_1 = arith.constant 0 : index
    %0 = vector.load %arg2[%c0, %c0_0, %c0_1] : memref<1x8x256xf32, #tpu.memory_space<vmem>>, vector<1x8x256xf32>
    %1 = vector.shape_cast %0 : vector<1x8x256xf32> to vector<8x256xf32>
    %2 = arith.truncf %1 : vector<8x256xf32> to vector<8x256xbf16>
    %c0_2 = arith.constant 0 : index
    %c0_3 = arith.constant 0 : index
    %3 = vector.load %arg3[%c0_2, %c0_3] : memref<4x8xbf16, #tpu.memory_space<vmem>>, vector<4x8xbf16>
    %cst = arith.constant dense<0.000000e+00> : vector<4x256xf32>
    %4 = tpu.matmul %3, %2, %cst {dimension_numbers = #tpu.dot_dimension_numbers<[1], [0], [0], [1], [0, 0, 1, 1], [], []>} : vector<4x8xbf16>, vector<8x256xbf16>, vector<4x256xf32> -> vector<4x256xf32>
    %c0_4 = arith.constant 0 : index
    %c0_5 = arith.constant 0 : index
    %5 = vector.load %arg4[%c0_4, %c0_5] : memref<4x1xf32, #tpu.memory_space<vmem>>, vector<4x1xf32>
    %6 = vector.broadcast %5 : vector<4x1xf32> to vector<4x256xf32>
    %7 = arith.addf %4, %6 : vector<4x256xf32>
    %c0_6 = arith.constant 0 : index
    %c0_7 = arith.constant 0 : index
    %c0_8 = arith.constant 0 : index
    %8 = vector.load %arg5[%c0_6, %c0_7, %c0_8] : memref<1x4x256xf32, #tpu.memory_space<vmem>>, vector<1x4x256xf32>
    %9 = vector.shape_cast %8 : vector<1x4x256xf32> to vector<4x256xf32>
    %10 = vector.shape_cast %7 : vector<4x256xf32> to vector<1x4x256xf32>
    tpu.vector_store %arg5[%c0_6, %c0_7, %c0_8], %10 {strides = array<i32>} : memref<1x4x256xf32, #tpu.memory_space<vmem>>, vector<1x4x256xf32>,
    return
  }
  func.func @transform_0(%arg0: i32, %arg1: i32) -> (i32, i32, i32) {
    %c0_i32 = arith.constant 0 : i32
    %c0_i32_0 = arith.constant 0 : i32
    return %arg0, %c0_i32, %arg1 : i32, i32, i32
  }
  func.func @transform_1(%arg0: i32, %arg1: i32) -> (i32, i32) {
    %c0_i32 = arith.constant 0 : i32
    %c0_i32_0 = arith.constant 0 : i32
    %c0_i32_1 = arith.constant 0 : i32
    return %c0_i32, %c0_i32_0 : i32, i32
  }
  func.func @transform_2(%arg0: i32, %arg1: i32) -> (i32, i32) {
    %c0_i32 = arith.constant 0 : i32
    %c0_i32_0 = arith.constant 0 : i32
    %c0_i32_1 = arith.constant 0 : i32
    return %c0_i32, %c0_i32_0 : i32, i32
  }
  func.func @transform_3(%arg0: i32, %arg1: i32) -> (i32, i32, i32) {
    %c0_i32 = arith.constant 0 : i32
    %c0_i32_0 = arith.constant 0 : i32
    return %arg0, %c0_i32, %arg1 : i32, i32, i32
  }
}

</mosaic_0001>

<llo_original>
// kernel: tpu_custom_call.1
$region0: #{tpu_custom_call.1}
  #allocation0 [shape = 'u32[]', space=smem, size = 0x4, offset = 0x4, fixed_abs, tag = 'smem constant byte address 0x4 - core index']
  #allocation1 [shape = 'u32[144,128]{1,0:T(1,128)}', space=vmem, size = 0x12000, scoped, tag = 'internal scratch']
  %s0 = inlined_call_operand.hbm [shape: f32[2,8,256], index: 0, kind: input, shape index: {}]
  %s1 = inlined_call_operand.vmem [shape: bf16[4,8], index: 1, kind: input, shape index: {}]
  %s2 = inlined_call_operand.vmem [shape: f32[4,1], index: 2, kind: input, shape index: {}]
  %s3 = inlined_call_operand.hbm [shape: f32[2,4,256], index: 3, kind: output, shape index: {}]
  %s4 = sld [smem:[#allocation0]]
  $region49: #{tpu_custom_call.1} parent=0
    _
  %s6 = ssub.s32 1, %s4
  %s7 = scalar_select 0, %s6, %s4
  $region1: #{tpu_custom_call.1} parent=0
    #allocation2 [shape = 'u8[16384]{0}', space=vmem, size = 0x4000, scoped, tag = 'input window, operand 0']
    #allocation3 [shape = 's32[2]{0}', space=sflag, size = 0x8, scoped, tag = 'scoped memory for tpu_custom_call.1']
    #allocation4 [shape = 's32[2]{0}', space=sflag, size = 0x8, scoped, tag = 'scoped memory for tpu_custom_call.1']
    #allocation5 [shape = 'u8[8192]{0}', space=vmem, size = 0x2000, scoped, tag = 'output window, operand 0']
    %8 = vsyncpa [#allocation3], 0
    %s9 = scalar_lea.sflag [#allocation3], 1
    %10 = vsyncpa %s9, 0
    %11 = vsyncpa [#allocation4], 0
    %s12 = scalar_lea.sflag [#allocation4], 1
    %13 = vsyncpa %s12, 0
    loop: start=0, step=1, limit=4
    $region2: #{tpu_custom_call.1} parent=1 // loop_pre_header
      _
    $region3: #{tpu_custom_call.1} parent=1 // loop_header
      %s15 = sphi 0, %s19
      %p16 = scmp.ge.s32.totalorder %s15, 4
      %s22 = sphi 0, %s34
      %s23 = sphi 0, %s30
      %s24 = sphi 0, %s22
      %s25 = sphi 0, %s23
      %s26 = sphi 0, %s24
      %s27 = sphi 0, %s25
      %s39 = sphi 0, %s41
      %s42 = sphi 0, %s39
      %s43 = sphi 0, %s42
      %s59 = sphi 0, %s43
      %s63 = sphi 0, %s63
      %s65 = sphi 0, %s63
      %s66 = sphi 0, %s65
      %s80 = sphi 0, %s66
      %s84 = sphi 0, %s84
      %s86 = sphi 0, %s84
      %s87 = sphi 0, %s86
      %s101 = sphi 0, %s87
      %s109 = sphi 0, %s111
      %s112 = sphi 0, %s109
      %s113 = sphi 0, %s112
      %s129 = sphi 0, %s113
    $region4: #{tpu_custom_call.1} parent=1 // loop_header_branch
      %18 = sbr.rel (%p16) target = $region8
    $region5: #{tpu_custom_call.1} parent=1 // loop_body
      %s20 = ssub.s32 %s15, 1
      %s21 = ssub.s32 %s15, 2
      %s28 = sadd.s32 1, %s23
      %p29 = scmp.ge.s32.totalorder %s28, 1
      %s30 = scalar_select %p29, 0, %s28
      %s31 = sadd.s32 1, %s22
      %s32 = scalar_select %p29, %s31, %s22
      %p33 = scmp.ge.s32.totalorder %s32, 2
      %s34 = scalar_select %p33, 0, %s32
      %s35 = ssub.s32 %s22, %s34
      %s36 = ssub.s32 %s23, %s30
      %s37 = sor.u32 %s35, %s36
      %p38 = scmp.eq.s32.totalorder %s37, 0
      %s40 = sadd.s32 %s39, 1
      %s41 = scalar_select %p38, %s39, %s40
      %p44 = pneg %p38
      %p45 = scmp.eq.s32.totalorder %s15, 1
      %p46 = por %p44, %p45
      %p47 = scmp.ne.s32.totalorder %s39, %s42
      %p48 = scmp.eq.s32.totalorder %s15, 0
      %p49 = por %p47, %p48
      %p50 = scmp.ne.s32.totalorder %s39, %s42
      %p51 = scmp.eq.s32.totalorder %s20, 1
      %p52 = por %p50, %p51
      %p53 = scmp.ne.s32.totalorder %s42, %s43
      %p54 = scmp.eq.s32.totalorder %s20, 0
      %p55 = por %p53, %p54
      %p56 = scmp.ne.s32.totalorder %s42, %s43
      %p57 = scmp.eq.s32.totalorder %s21, 1
      %p58 = por %p56, %p57
      %p60 = scmp.ne.s32.totalorder %s43, %s59
      %p61 = scmp.eq.s32.totalorder %s21, 0
      %p62 = por %p60, %p61
      %s64 = sadd.s32 %s63, 1
      %p67 = scmp.eq.s32.totalorder %s15, 1
      %p68 = scmp.ne.s32.totalorder %s63, %s65
      %p69 = scmp.eq.s32.totalorder %s15, 0
      %p70 = por %p68, %p69
      %p71 = scmp.ne.s32.totalorder %s63, %s65
      %p72 = scmp.eq.s32.totalorder %s20, 1
      %p73 = por %p71, %p72
      %p74 = scmp.ne.s32.totalorder %s65, %s66
      %p75 = scmp.eq.s32.totalorder %s20, 0
      %p76 = por %p74, %p75
      %p77 = scmp.ne.s32.totalorder %s65, %s66
      %p78 = scmp.eq.s32.totalorder %s21, 1
      %p79 = por %p77, %p78
      %p81 = scmp.ne.s32.totalorder %s66, %s80
      %p82 = scmp.eq.s32.totalorder %s21, 0
      %p83 = por %p81, %p82
      %s85 = sadd.s32 %s84, 1
      %p88 = scmp.eq.s32.totalorder %s15, 1
      %p89 = scmp.ne.s32.totalorder %s84, %s86
      %p90 = scmp.eq.s32.totalorder %s15, 0
      %p91 = por %p89, %p90
      %p92 = scmp.ne.s32.totalorder %s84, %s86
      %p93 = scmp.eq.s32.totalorder %s20, 1
      %p94 = por %p92, %p93
      %p95 = scmp.ne.s32.totalorder %s86, %s87
      %p96 = scmp.eq.s32.totalorder %s20, 0
      %p97 = por %p95, %p96
      %p98 = scmp.ne.s32.totalorder %s86, %s87
      %p99 = scmp.eq.s32.totalorder %s21, 1
      %p100 = por %p98, %p99
      %p102 = scmp.ne.s32.totalorder %s87, %s101
      %p103 = scmp.eq.s32.totalorder %s21, 0
      %p104 = por %p102, %p103
      %s105 = ssub.s32 %s22, %s34
      %s106 = ssub.s32 %s23, %s30
      %s107 = sor.u32 %s105, %s106
      %p108 = scmp.eq.s32.totalorder %s107, 0
      %s110 = sadd.s32 %s109, 1
      %s111 = scalar_select %p108, %s109, %s110
      %p114 = pneg %p108
      %p115 = scmp.eq.s32.totalorder %s15, 1
      %p116 = por %p114, %p115
      %p117 = scmp.ne.s32.totalorder %s109, %s112
      %p118 = scmp.eq.s32.totalorder %s15, 0
      %p119 = por %p117, %p118
      %p120 = scmp.ne.s32.totalorder %s109, %s112
      %p121 = scmp.eq.s32.totalorder %s20, 1
      %p122 = por %p120, %p121
      %p123 = scmp.ne.s32.totalorder %s112, %s113
      %p124 = scmp.eq.s32.totalorder %s20, 0
      %p125 = por %p123, %p124
      %p126 = scmp.ne.s32.totalorder %s112, %s113
      %p127 = scmp.eq.s32.totalorder %s21, 1
      %p128 = por %p126, %p127
      %p130 = scmp.ne.s32.totalorder %s113, %s129
      %p131 = scmp.eq.s32.totalorder %s21, 0
      %p132 = por %p130, %p131
      %p133 = scmp.le.s32.totalorder 1, %s15
      %p134 = scmp.lt.s32.totalorder %s15, 3
      %p135 = pnand %p133, %p134
      %p136 = pneg %p135
      // Predicated region
      $region9: #{tpu_custom_call.1} parent=5 // pred_check
        _
      $region10: #{tpu_custom_call.1} parent=5 // pred_check_branch
        %138 = sbr.rel (%p135) target = $region12
      $region11: #{tpu_custom_call.1} parent=5 // pred_region
        %s139 = ssub.s32 %s15, 1
        // Predicated region
        $region13: #{tpu_custom_call.1} parent=11 // pred_check
          %p140 = pneg %p76
        $region14: #{tpu_custom_call.1} parent=11 // pred_check_branch
          %142 = sbr.rel (%p140) target = $region16
        $region15: #{tpu_custom_call.1} parent=11 // pred_region
          _
        $region16: #{tpu_custom_call.1} parent=11 // pred_fallthru
          _
        // Predicated region
        $region17: #{tpu_custom_call.1} parent=11 // pred_check
          %p143 = pneg %p97
        $region18: #{tpu_custom_call.1} parent=11 // pred_check_branch
          %145 = sbr.rel (%p143) target = $region20
        $region19: #{tpu_custom_call.1} parent=11 // pred_region
          _
        $region20: #{tpu_custom_call.1} parent=11 // pred_fallthru
          _
      $region12: #{tpu_custom_call.1} parent=5 // pred_fallthru
        _
      %p146 = scmp.lt.s32.totalorder %s15, 2
      // Predicated region
      $region21: #{tpu_custom_call.1} parent=5 // pred_check
        %p147 = pneg %p146
      $region22: #{tpu_custom_call.1} parent=5 // pred_check_branch
        %149 = sbr.rel (%p147) target = $region24
      $region23: #{tpu_custom_call.1} parent=5 // pred_region
        // Predicated region
        $region25: #{tpu_custom_call.1} parent=23 // pred_check
          %p150 = pneg %p49
        $region26: #{tpu_custom_call.1} parent=23 // pred_check_branch
          %152 = sbr.rel (%p150) target = $region28
        $region27: #{tpu_custom_call.1} parent=23 // pred_region
          %s153 = sand.u32 %s39, 1
          %s154 = scalar_lea.sflag [#allocation3], %s153
          %s155 = sand.u32 %s39, 1
          %s156 = smul.addr %s155, 16
          %s157 = scalar_lea.vmem [#allocation2], %s156
          %s158 = smul.u32 2, %s23
          %s160 = ssub.s32 256, 256
          %161 = vsyncadd %s154, %s160
          %s162 = smul.addr %s22, 2
          %s163 = sadd.s32 %s158, %s162
          %s164 = smul.addr %s163, 128
          %s165 = scalar_lea.hbm %s0, %s164
          %s167 = sshll.u32 %s157, 4
          %s168 = int_to_ptr.vmem [resolvable:$true] %s167
          %170 = dma.hbm_to_vmem [thread:$0]  %s165, 256, %s168, %s154
        $region28: #{tpu_custom_call.1} parent=23 // pred_fallthru
          _
      $region24: #{tpu_custom_call.1} parent=5 // pred_fallthru
        _
      %p171 = scmp.le.s32.totalorder 1, %s15
      %p172 = scmp.lt.s32.totalorder %s15, 3
      %p173 = pnand %p171, %p172
      %p174 = pneg %p173
      // Predicated region
      $region29: #{tpu_custom_call.1} parent=5 // pred_check
        _
      $region30: #{tpu_custom_call.1} parent=5 // pred_check_branch
        %176 = sbr.rel (%p173) target = $region32
      $region31: #{tpu_custom_call.1} parent=5 // pred_region
        %s177 = ssub.s32 %s15, 1
        %s178 = sand.u32 %s42, 1
        %s179 = scalar_lea.sflag [#allocation3], %s178
        %s180 = sand.u32 %s42, 1
        %s181 = smul.addr %s180, 16
        %s182 = scalar_lea.vmem [#allocation2], %s181
        // Predicated region
        $region33: #{tpu_custom_call.1} parent=31 // pred_check
          %p183 = pneg %p55
        $region34: #{tpu_custom_call.1} parent=31 // pred_check_branch
          %185 = sbr.rel (%p183) target = $region36
        $region35: #{tpu_custom_call.1} parent=31 // pred_region
          %186 = dma.done %s179, 256
        $region36: #{tpu_custom_call.1} parent=31 // pred_fallthru
          _
        %s187 = sand.u32 %s42, 1
        %s188 = scalar_lea.sflag [#allocation3], %s187
        %s189 = sand.u32 %s42, 1
        %s190 = smul.addr %s189, 16
        %s191 = scalar_lea.vmem [#allocation2], %s190
        %p192 = pneg %p55
        %p193 = pneg %p52
        %p194 = pneg %p76
        %p195 = pneg %p73
        %p196 = pneg %p97
        %p197 = pneg %p94
        %p198 = pneg %p125
        %p199 = pneg %p122
        %s200 = sand.u32 %s112, 1
        %s201 = scalar_lea.sflag [#allocation4], %s200
        %s202 = sand.u32 %s112, 1
        %s203 = smul.addr %s202, 8
        %s204 = scalar_lea.vmem [#allocation5], %s203
        %s205 = smul.u32 2, %s25
        %s206 = smul.u32 2, %s25
        %v208 = vld [vmem:[%s182] sm:$0xff]
        %v209 = vld [vmem:[%s182 + $0x8] sm:$0xff]
        %v210 = vpack.c.bf16 %v208, %v208
        %v211 = vpack.c.bf16 %v209, %v209
        %v212 = vld [vmem:[%s1] sm:$0x3]
        %v213 = vld [vmem:[%s2] sm:$0xf]
        %215 = vset.pattern.permute.xlu0 0
        %216 = vperm.xlu0 %215, %v213
        %v217 = vpop.permute.xlu0 %216
        %vm219 = vcmask 64512
        %v221 = vsel %vm219, %v212, 0
        %vm223 = vcmask 1043456
        %v225 = vsel %vm223, %v210, 0
        %v228 = vsel %vm223, %v211, 0
        %230 = vmatprep.subr.bf16.mxu0 0
        %231 = vmatpush1.bf16.msra.mxu0 0
        %232 = vmatprep.subr.bf16.mxu0 0
        %233 = vmatpush1.bf16.msra.mxu0 0
        %234 = vmatprep.subr.bf16.mxu0 0
        %235 = vmatpush1.bf16.msra.mxu0 0
        %236 = vmatprep.subr.bf16.mxu0 0
        %237 = vmatpush1.bf16.msra.mxu0 0
        %238 = vmatprep.subr.bf16.mxu0 0
        %239 = vmatpush1.bf16.msra.mxu0 0
        %240 = vmatprep.subr.bf16.mxu0 0
        %241 = vmatpush1.bf16.msra.mxu0 0
        %242 = vmatprep.subr.bf16.mxu0 0
        %243 = vmatpush1.bf16.msra.mxu0 0
        %244 = vmatprep.subr.bf16.mxu0 %v228
        %245 = vmatpush1.bf16.msra.mxu0 %v225
        %246 = vmatprep.subr.bf16.mxu0 0
        %247 = vmatpush2.bf16.msra.mxu0 0
        %248 = vmatprep.subr.bf16.mxu0 0
        %249 = vmatpush2.bf16.msra.mxu0 0
        %250 = vmatprep.subr.bf16.mxu0 0
        %251 = vmatpush2.bf16.msra.mxu0 0
        %252 = vmatprep.subr.bf16.mxu0 0
        %253 = vmatpush2.bf16.msra.mxu0 0
        %254 = vmatprep.subr.bf16.mxu0 0
        %255 = vmatpush2.bf16.msra.mxu0 0
        %256 = vmatprep.subr.bf16.mxu0 0
        %257 = vmatpush2.bf16.msra.mxu0 0
        %258 = vmatprep.subr.bf16.mxu0 0
        %259 = vmatpush2.bf16.msra.mxu0 0
        %260 = vmatprep.subr.bf16.mxu0 0
        %261 = vmatpush2.bf16.msra.mxu0 0
        %262 = vmatprep.mubr.bf16.mxu0 0
        %263 = vmatmul.mubr.bf16.gmra.mxu0 %v221
        %v264 = vpop.f32.mrf.mxu0
        %v265 = vadd.f32 %v217, %v264
        %v266 = vpop.f32.mrf.mxu0
        %v267 = vadd.f32 %v217, %v266
        %v268 = vpop.f32.mrf.mxu0
        %v269 = vpop.f32.mrf.mxu0
        %270 = vdwg.mxu0
        %v273 = vcombine.low %v265, %v267
        %275 = vst [vmem:[%s204] sm:$0xff] %v273
        %s276 = sand.u32 %s112, 1
        %s277 = scalar_lea.sflag [#allocation4], %s276
        %s278 = sand.u32 %s112, 1
        %s279 = smul.addr %s278, 8
        %s280 = scalar_lea.vmem [#allocation5], %s279
        // Predicated region
        $region37: #{tpu_custom_call.1} parent=31 // pred_check
          %p281 = pneg %p122
        $region38: #{tpu_custom_call.1} parent=31 // pred_check_branch
          %283 = sbr.rel (%p281) target = $region40
        $region39: #{tpu_custom_call.1} parent=31 // pred_region
          %s284 = smul.u32 2, %s25
          %s286 = ssub.s32 128, 128
          %287 = vsyncadd %s277, %s286
          %s288 = smul.addr %s24, 2
          %s289 = sadd.s32 %s284, %s288
          %s290 = smul.addr %s289, 64
          %s291 = scalar_lea.hbm %s3, %s290
          %s293 = sshll.u32 %s280, 4
          %s294 = int_to_ptr.vmem [resolvable:$true] %s293
          %296 = dma.vmem_to_hbm [thread:$0]  %s294, 128, %s291, %s277
        $region40: #{tpu_custom_call.1} parent=31 // pred_fallthru
          _
      $region32: #{tpu_custom_call.1} parent=5 // pred_fallthru
        _
      %p297 = scmp.le.s32.totalorder 2, %s15
      // Predicated region
      $region41: #{tpu_custom_call.1} parent=5 // pred_check
        %p298 = pneg %p297
      $region42: #{tpu_custom_call.1} parent=5 // pred_check_branch
        %300 = sbr.rel (%p298) target = $region44
      $region43: #{tpu_custom_call.1} parent=5 // pred_region
        %s301 = ssub.s32 %s15, 2
        // Predicated region
        $region45: #{tpu_custom_call.1} parent=43 // pred_check
          %p302 = pneg %p128
        $region46: #{tpu_custom_call.1} parent=43 // pred_check_branch
          %304 = sbr.rel (%p302) target = $region48
        $region47: #{tpu_custom_call.1} parent=43 // pred_region
          %s305 = sand.u32 %s113, 1
          %s306 = scalar_lea.sflag [#allocation4], %s305
          %s307 = sand.u32 %s113, 1
          %s308 = smul.addr %s307, 8
          %s309 = scalar_lea.vmem [#allocation5], %s308
          %310 = dma.done %s306, 128
        $region48: #{tpu_custom_call.1} parent=43 // pred_fallthru
          _
      $region44: #{tpu_custom_call.1} parent=5 // pred_fallthru
        _
    $region6: #{tpu_custom_call.1} parent=1 // loop_footer
      %s19 = sadd.s32 1, %s15
    $region7: #{tpu_custom_call.1} parent=1 // loop_footer_branch
      %14 = sbr.rel target = $region3
    $region8: #{tpu_custom_call.1} parent=1 // loop_exit
      _
    %311 = vsyncpa [#allocation3], 1
    %s312 = scalar_lea.sflag [#allocation3], 1
    %313 = vsyncpa %s312, 1
    %314 = vsyncpa [#allocation4], 1
    %s315 = scalar_lea.sflag [#allocation4], 1
    %316 = vsyncpa %s315, 1

</llo_original>
